<compile_context>
chip_gen: v5e
topology: v5e:2x2
jax: 0.10.0
libtpu: 0.0.40
codegen_flags: <defaults>
</compile_context>

<pallas_src>
import functools

import jax
import jax.numpy as jnp
from jax.experimental import pallas as pl
from jax.experimental.pallas import tpu as pltpu


def _parse_patterns(patterns):
    plist = []
    for pattern in patterns.split(","):
        m_s, n_s = pattern.split(":")
        plist.append((int(m_s), int(n_s)))
    return tuple(plist)


def _fused_sparsify_kernel(w_ref, out_ref, mask_ref, *, plist, norm, C):
    """Fused multi-pattern mask + weight*mask on a (C, Lb) block.

    Layout: channels (the grouping axis) on sublanes, lane-dense padded
    N*H*W axis on lanes.  The running mask lives only in registers/VMEM
    values; no HBM round trip between patterns.

    Per pattern "m:n", a group element i is selected iff fewer than n group
    members beat it, where j beats i when v_j > v_i or (v_j == v_i and j < i)
    (stable-topk / lower-index-first tie rule).  Group members are visited
    with sublane rolls; for each step s two roll candidates (shift C-s and
    m-s) are taken and the one whose rolled channel index lands inside the
    row's own group is selected, which handles group wrap-around and makes
    the code independent of the roll sign convention.
    """
    w = w_ref[...]                                   # (C, Lb)
    wf = w.astype(jnp.float32)
    wn = (jnp.abs(wf) if norm == "l1" else wf * wf) + 1e-7

    ch = jax.lax.broadcasted_iota(jnp.int32, wn.shape, 0)   # channel row index
    mask = jnp.zeros_like(wn)

    for (m, n) in plist:
        if n >= m:                                   # whole group selected
            mask = jnp.ones_like(wn)
            continue
        v = (1.0 - mask) * wn
        p = ch % m                                   # intra-group position
        lo = ch - p                                  # first row of own group
        hi = lo + (m - 1)                            # last row of own group
        rank = jnp.zeros(wn.shape, jnp.int32)
        for s in range(1, m):                        # m is tiny -> static unroll
            u1 = pltpu.roll(v, C - s, 0)
            c1 = pltpu.roll(ch, C - s, 0)
            u2 = pltpu.roll(v, m - s, 0)
            c2 = pltpu.roll(ch, m - s, 0)
            in1 = (c1 >= lo) & (c1 <= hi)            # candidate 1 in own group?
            u = jnp.where(in1, u1, u2)
            uc = jnp.where(in1, c1, c2)
            beats = (u > v) | ((u == v) & (uc < ch))
            rank = rank + beats.astype(jnp.int32)
        mask = jnp.maximum(mask, (rank < n).astype(jnp.float32))

    out_ref[...] = (wf * mask).astype(out_ref.dtype)
    mask_ref[...] = mask.astype(mask_ref.dtype)


def per_chl_mpln_sparsify(weight, patterns="4:2", norm="l1",
                          target_block_bytes=1 << 20):
    """Pallas implementation of PerChlMPLnSparsifier.forward(weight).

    Returns (weight * mask, mask), both shaped like `weight` (NCHW); the mask
    is in the weight dtype (values are exactly 0/1).
    """
    assert norm in ("l1", "l2")
    N, C, H, W = weight.shape
    plist = _parse_patterns(patterns)
    for m, n in plist:
        assert C % m == 0, f"C={C} not divisible by pattern group m={m}"
        assert 0 < n <= m, f"invalid pattern {m}:{n}"

    # Lane-dense layout: (C, N*H*W), channels on sublanes, N*H*W on lanes.
    L = N * H * W
    wt = jnp.transpose(weight, (1, 0, 2, 3)).reshape(C, L)

    # Lane-block size: multiple of 128, ~target_block_bytes per (C, Lb) block.
    # ~1 MiB blocks keep double-buffered in/out/mask plus in-kernel temporaries
    # comfortably inside scoped VMEM on v5e/v6e/v7x (bump on v6e if desired).
    lanes = max(128, (target_block_bytes // (C * 4)) // 128 * 128)
    Lb = min(lanes, pl.cdiv(L, 128) * 128)
    L_pad = pl.cdiv(L, Lb) * Lb
    if L_pad != L:
        wt = jnp.pad(wt, ((0, 0), (0, L_pad - L)))
    grid = (L_pad // Lb,)

    kern = functools.partial(_fused_sparsify_kernel, plist=plist, norm=norm, C=C)
    out_t, mask_t = pl.pallas_call(
        kern,
        out_shape=(
            jax.ShapeDtypeStruct((C, L_pad), weight.dtype),
            jax.ShapeDtypeStruct((C, L_pad), weight.dtype),
        ),
        grid=grid,
        in_specs=[pl.BlockSpec((C, Lb), lambda i: (0, i))],
        out_specs=(
            pl.BlockSpec((C, Lb), lambda i: (0, i)),
            pl.BlockSpec((C, Lb), lambda i: (0, i)),
        ),
        compiler_params=pltpu.CompilerParams(
            dimension_semantics=("parallel",),      # lets v7x's 2 TCs split the grid
            vmem_limit_bytes=32 * 1024 * 1024,      # v5e default scoped VMEM is 16 MiB
        ),
    )(wt)

    def _back(x):
        return jnp.transpose(x[:, :L].reshape(C, N, H, W), (1, 0, 2, 3))

    return _back(out_t), _back(mask_t)


def _reference(weight, patterns, norm):
    """Pure-JAX reference mirroring the PyTorch compute_mask / forward."""
    N, C, H, W = weight.shape
    wn = (jnp.abs(weight) if norm == "l1" else weight ** 2) + 1e-7
    mask = jnp.zeros_like(wn)
    for pattern in patterns.split(","):
        m, n = (int(v) for v in pattern.split(":"))
        mw = ((1.0 - mask) * wn).reshape(N, C // m, m, H, W)
        order = jnp.argsort(-mw, axis=2)           # stable, descending
        ranks = jnp.argsort(order, axis=2)
        sel = (ranks < n).astype(mask.dtype)
        mask = jnp.maximum(mask.reshape(N, C // m, m, H, W), sel)
        mask = mask.reshape(N, C, H, W)
    return weight * mask, mask


# TODO(synk): the module's freeze_mask / cached self.mask / init_from logic is
# host-side nn.Module state, not kernel work; only the forward compute is here.

if __name__ == "__main__":
    key = jax.random.PRNGKey(0)
    configs = [
        ((2, 8, 16, 16), "4:2", "l1"),
        ((2, 8, 16, 16), "8:6,4:2", "l2"),
        ((4, 8, 3, 3), "4:2", "l1"),      # 3x3-conv style: exercises lane padding
    ]
    for shape, patterns, norm in configs:
        key, sub = jax.random.split(key)
        weight = jax.random.normal(sub, shape, dtype=jnp.float32)
        out, mask = per_chl_mpln_sparsify(weight, patterns=patterns, norm=norm)
        out = jax.block_until_ready(out)
        ref_out, ref_mask = _reference(weight, patterns, norm)
        assert jnp.allclose(mask, ref_mask), f"mask mismatch {shape} {patterns}"
        assert jnp.allclose(out, ref_out, atol=1e-6), f"out mismatch {shape} {patterns}"
    print("KERNEL_OK")
</pallas_src>

<mosaic_0001>
module attributes {stable_mosaic.version = 11 : i64} {
  func.func @_fused_sparsify_kernel(%arg0: i32, %arg1: memref<8x512xf32, #tpu.memory_space<vmem>>, %arg2: memref<8x512xf32, #tpu.memory_space<vmem>>, %arg3: memref<8x512xf32, #tpu.memory_space<vmem>>) attributes {dimension_semantics = [#tpu.dimension_semantics<parallel>], iteration_bounds = array<i64: 1>, scalar_prefetch = 0 : i64, scratch_operands = 0 : i64, tpu.core_type = #tpu.core_type<tc>, window_params = [{transform_indices = @transform_0, window_bounds = array<i64: 8, 512>}, {transform_indices = @transform_1, window_bounds = array<i64: 8, 512>}, {transform_indices = @transform_2, window_bounds = array<i64: 8, 512>}]} {
    %c0 = arith.constant 0 : index
    %c0_0 = arith.constant 0 : index
    %0 = vector.load %arg1[%c0, %c0_0] : memref<8x512xf32, #tpu.memory_space<vmem>>, vector<8x512xf32>
    %1 = math.absf %0 : vector<8x512xf32>
    %cst = arith.constant 1.000000e-07 : f32
    %2 = vector.broadcast %cst : f32 to vector<8x512xf32>
    %3 = arith.addf %1, %2 : vector<8x512xf32>
    %4 = tpu.iota {dimensions = array<i32: 0>} : vector<8x512xi32>
    %cst_1 = arith.constant 0.000000e+00 : f32
    %5 = vector.broadcast %cst_1 : f32 to vector<8x512xf32>
    %cst_2 = arith.constant 1.000000e+00 : f32
    %6 = vector.broadcast %cst_2 : f32 to vector<8x512xf32>
    %7 = arith.subf %6, %5 : vector<8x512xf32>
    %8 = arith.mulf %7, %3 : vector<8x512xf32>
    %c4_i32 = arith.constant 4 : i32
    %c0_i32 = arith.constant 0 : i32
    %9 = arith.cmpi eq, %c4_i32, %c0_i32 : i32
    %c1_i32 = arith.constant 1 : i32
    %10 = arith.select %9, %c1_i32, %c4_i32 : i32
    %11 = vector.broadcast %10 : i32 to vector<8x512xi32>
    %12 = arith.remsi %4, %11 : vector<8x512xi32>
    %c0_i32_3 = arith.constant 0 : i32
    %13 = vector.broadcast %c0_i32_3 : i32 to vector<8x512xi32>
    %14 = arith.cmpi ne, %12, %13 : vector<8x512xi32>
    %c0_i32_4 = arith.constant 0 : i32
    %15 = vector.broadcast %c0_i32_4 : i32 to vector<8x512xi32>
    %16 = arith.cmpi slt, %12, %15 : vector<8x512xi32>
    %c0_i32_5 = arith.constant 0 : i32
    %17 = arith.cmpi slt, %10, %c0_i32_5 : i32
    %18 = vector.broadcast %17 : i1 to vector<8x512xi1>
    %19 = vector.broadcast %18 : vector<8x512xi1> to vector<8x512xi1>
    %20 = arith.xori %16, %19 : vector<8x512xi1>
    %21 = arith.andi %20, %14 : vector<8x512xi1>
    %22 = vector.broadcast %10 : i32 to vector<8x512xi32>
    %23 = arith.addi %12, %22 : vector<8x512xi32>
    %24 = arith.select %21, %23, %12 : vector<8x512xi1>, vector<8x512xi32>
    %25 = arith.subi %4, %24 : vector<8x512xi32>
    %c3_i32 = arith.constant 3 : i32
    %26 = vector.broadcast %c3_i32 : i32 to vector<8x512xi32>
    %27 = arith.addi %25, %26 : vector<8x512xi32>
    %c0_i32_6 = arith.constant 0 : i32
    %28 = vector.broadcast %c0_i32_6 : i32 to vector<8x512xi32>
    %c7_i32 = arith.constant 7 : i32
    %29 = tpu.dynamic_rotate %8 by %c7_i32 dim 0 : vector<8x512xf32>, i32 -> vector<8x512xf32>
    %c7_i32_7 = arith.constant 7 : i32
    %30 = tpu.dynamic_rotate %4 by %c7_i32_7 dim 0 : vector<8x512xi32>, i32 -> vector<8x512xi32>
    %c3_i32_8 = arith.constant 3 : i32
    %31 = tpu.dynamic_rotate %8 by %c3_i32_8 dim 0 : vector<8x512xf32>, i32 -> vector<8x512xf32>
    %c3_i32_9 = arith.constant 3 : i32
    %32 = tpu.dynamic_rotate %4 by %c3_i32_9 dim 0 : vector<8x512xi32>, i32 -> vector<8x512xi32>
    %33 = arith.cmpi sge, %30, %25 : vector<8x512xi32>
    %34 = arith.cmpi sle, %30, %27 : vector<8x512xi32>
    %35 = arith.andi %33, %34 : vector<8x512xi1>
    %36 = arith.select %35, %29, %31 : vector<8x512xi1>, vector<8x512xf32>
    %37 = arith.select %35, %30, %32 : vector<8x512xi1>, vector<8x512xi32>
    %38 = arith.cmpf ogt, %36, %8 : vector<8x512xf32>
    %39 = arith.cmpf oeq, %36, %8 : vector<8x512xf32>
    %40 = arith.cmpi slt, %37, %4 : vector<8x512xi32>
    %41 = arith.andi %39, %40 : vector<8x512xi1>
    %42 = arith.ori %38, %41 : vector<8x512xi1>
    %43 = arith.extui %42 : vector<8x512xi1> to vector<8x512xi32>
    %44 = arith.addi %28, %43 : vector<8x512xi32>
    %c6_i32 = arith.constant 6 : i32
    %45 = tpu.dynamic_rotate %8 by %c6_i32 dim 0 : vector<8x512xf32>, i32 -> vector<8x512xf32>
    %c6_i32_10 = arith.constant 6 : i32
    %46 = tpu.dynamic_rotate %4 by %c6_i32_10 dim 0 : vector<8x512xi32>, i32 -> vector<8x512xi32>
    %c2_i32 = arith.constant 2 : i32
    %47 = tpu.dynamic_rotate %8 by %c2_i32 dim 0 : vector<8x512xf32>, i32 -> vector<8x512xf32>
    %c2_i32_11 = arith.constant 2 : i32
    %48 = tpu.dynamic_rotate %4 by %c2_i32_11 dim 0 : vector<8x512xi32>, i32 -> vector<8x512xi32>
    %49 = arith.cmpi sge, %46, %25 : vector<8x512xi32>
    %50 = arith.cmpi sle, %46, %27 : vector<8x512xi32>
    %51 = arith.andi %49, %50 : vector<8x512xi1>
    %52 = arith.select %51, %45, %47 : vector<8x512xi1>, vector<8x512xf32>
    %53 = arith.select %51, %46, %48 : vector<8x512xi1>, vector<8x512xi32>
    %54 = arith.cmpf ogt, %52, %8 : vector<8x512xf32>
    %55 = arith.cmpf oeq, %52, %8 : vector<8x512xf32>
    %56 = arith.cmpi slt, %53, %4 : vector<8x512xi32>
    %57 = arith.andi %55, %56 : vector<8x512xi1>
    %58 = arith.ori %54, %57 : vector<8x512xi1>
    %59 = arith.extui %58 : vector<8x512xi1> to vector<8x512xi32>
    %60 = arith.addi %44, %59 : vector<8x512xi32>
    %c5_i32 = arith.constant 5 : i32
    %61 = tpu.dynamic_rotate %8 by %c5_i32 dim 0 : vector<8x512xf32>, i32 -> vector<8x512xf32>
    %c5_i32_12 = arith.constant 5 : i32
    %62 = tpu.dynamic_rotate %4 by %c5_i32_12 dim 0 : vector<8x512xi32>, i32 -> vector<8x512xi32>
    %c1_i32_13 = arith.constant 1 : i32
    %63 = tpu.dynamic_rotate %8 by %c1_i32_13 dim 0 : vector<8x512xf32>, i32 -> vector<8x512xf32>
    %c1_i32_14 = arith.constant 1 : i32
    %64 = tpu.dynamic_rotate %4 by %c1_i32_14 dim 0 : vector<8x512xi32>, i32 -> vector<8x512xi32>
    %65 = arith.cmpi sge, %62, %25 : vector<8x512xi32>
    %66 = arith.cmpi sle, %62, %27 : vector<8x512xi32>
    %67 = arith.andi %65, %66 : vector<8x512xi1>
    %68 = arith.select %67, %61, %63 : vector<8x512xi1>, vector<8x512xf32>
    %69 = arith.select %67, %62, %64 : vector<8x512xi1>, vector<8x512xi32>
    %70 = arith.cmpf ogt, %68, %8 : vector<8x512xf32>
    %71 = arith.cmpf oeq, %68, %8 : vector<8x512xf32>
    %72 = arith.cmpi slt, %69, %4 : vector<8x512xi32>
    %73 = arith.andi %71, %72 : vector<8x512xi1>
    %74 = arith.ori %70, %73 : vector<8x512xi1>
    %75 = arith.extui %74 : vector<8x512xi1> to vector<8x512xi32>
    %76 = arith.addi %60, %75 : vector<8x512xi32>
    %c2_i32_15 = arith.constant 2 : i32
    %77 = vector.broadcast %c2_i32_15 : i32 to vector<8x512xi32>
    %78 = arith.cmpi slt, %76, %77 : vector<8x512xi32>
    %79 = arith.extui %78 : vector<8x512xi1> to vector<8x512xi32>
    %80 = arith.sitofp %79 : vector<8x512xi32> to vector<8x512xf32>
    %81 = arith.maximumf %5, %80 : vector<8x512xf32>
    %82 = arith.mulf %0, %81 : vector<8x512xf32>
    %c0_16 = arith.constant 0 : index
    %c0_17 = arith.constant 0 : index
    %83 = vector.load %arg2[%c0_16, %c0_17] : memref<8x512xf32, #tpu.memory_space<vmem>>, vector<8x512xf32>
    tpu.vector_store %arg2[%c0_16, %c0_17], %82 {strides = array<i32>} : memref<8x512xf32, #tpu.memory_space<vmem>>, vector<8x512xf32>,
    %c0_18 = arith.constant 0 : index
    %c0_19 = arith.constant 0 : index
    %84 = vector.load %arg3[%c0_18, %c0_19] : memref<8x512xf32, #tpu.memory_space<vmem>>, vector<8x512xf32>
    tpu.vector_store %arg3[%c0_18, %c0_19], %81 {strides = array<i32>} : memref<8x512xf32, #tpu.memory_space<vmem>>, vector<8x512xf32>,
    return
  }
  func.func @transform_0(%arg0: i32) -> (i32, i32) {
    %c0_i32 = arith.constant 0 : i32
    %c0_i32_0 = arith.constant 0 : i32
    return %c0_i32, %arg0 : i32, i32
  }
  func.func @transform_1(%arg0: i32) -> (i32, i32) {
    %c0_i32 = arith.constant 0 : i32
    %c0_i32_0 = arith.constant 0 : i32
    return %c0_i32, %arg0 : i32, i32
  }
  func.func @transform_2(%arg0: i32) -> (i32, i32) {
    %c0_i32 = arith.constant 0 : i32
    %c0_i32_0 = arith.constant 0 : i32
    return %c0_i32, %arg0 : i32, i32
  }
}

</mosaic_0001>

<llo_original>
// kernel: tpu_custom_call.1
$region0: #{tpu_custom_call.1}
  #allocation0 [shape = 'u32[]', space=smem, size = 0x4, offset = 0x4, fixed_abs, tag = 'smem constant byte address 0x4 - core index']
  #allocation1 [shape = 'u32[72,128]{1,0:T(1,128)}', space=vmem, size = 0x9000, scoped, tag = 'internal scratch']
  %s0 = inlined_call_operand.hbm [shape: f32[8,512], index: 0, kind: input, shape index: {}]
  %s1 = inlined_call_operand.hbm [shape: f32[8,512], index: 1, kind: output, shape index: {0}]
  %s2 = inlined_call_operand.hbm [shape: f32[8,512], index: 2, kind: output, shape index: {1}]
  %3 = xla_tuple %s1, %s2
  %s4 = sld [smem:[#allocation0]]
  $region26: #{tpu_custom_call.1} parent=0
    _
  %s6 = ssub.s32 1, %s4
  %s7 = scalar_select 0, %s6, %s4
  $region1: #{tpu_custom_call.1} parent=0
    #allocation2 [shape = 'u8[16384]{0}', space=vmem, size = 0x4000, scoped, tag = 'input window, operand 0, single buffered']
    #allocation3 [shape = 's32[1]{0}', space=sflag, size = 0x4, scoped, tag = 'scoped memory for tpu_custom_call.1']
    #allocation4 [shape = 's32[1]{0}', space=sflag, size = 0x4, scoped, tag = 'scoped memory for tpu_custom_call.1']
    #allocation5 [shape = 'u8[16384]{0}', space=vmem, size = 0x4000, scoped, tag = 'output window, operand 0, single buffered']
    #allocation6 [shape = 'u8[16384]{0}', space=vmem, size = 0x4000, scoped, tag = 'output window, operand 1, single buffered']
    #allocation7 [shape = 's32[1]{0}', space=sflag, size = 0x4, scoped, tag = 'scoped memory for tpu_custom_call.1']
    %8 = vsyncpa [#allocation3], 0
    %9 = vsyncpa [#allocation4], 0
    %10 = vsyncpa [#allocation7], 0
    // Predicated region
    $region2: #{tpu_custom_call.1} parent=1 // pred_check
      _
    $region3: #{tpu_custom_call.1} parent=1 // pred_check_branch
      %12 = sbr.rel (0) target = $region5
    $region4: #{tpu_custom_call.1} parent=1 // pred_region
      %14 = vsyncadd [#allocation3], 0
      %s16 = sshll.u32 %s0, 4
      %s17 = int_to_ptr.hbm [resolvable:$true] %s16
      %s18 = sshll.u32 [#allocation2], 4
      %s19 = int_to_ptr.vmem [resolvable:$true] %s18
      %21 = dma.hbm_to_vmem [thread:$0]  %s17, 512, %s19, [#allocation3]
    $region5: #{tpu_custom_call.1} parent=1 // pred_fallthru
      _
    // Predicated region
    $region6: #{tpu_custom_call.1} parent=1 // pred_check
      _
    $region7: #{tpu_custom_call.1} parent=1 // pred_check_branch
      %23 = sbr.rel (0) target = $region9
    $region8: #{tpu_custom_call.1} parent=1 // pred_region
      %25 = dma.done [#allocation3], 512
    $region9: #{tpu_custom_call.1} parent=1 // pred_fallthru
      _
    %v26 = vld [vmem:[#allocation2] sm:$0xff]
    %v27 = vld [vmem:[#allocation2 + $0x8] sm:$0xff]
    %v28 = vld [vmem:[#allocation2 + $0x10] sm:$0xff]
    %v29 = vld [vmem:[#allocation2 + $0x18] sm:$0xff]
    %v30 = vand.u32 2147483647, %v26
    %v31 = vand.u32 2147483647, %v27
    %v32 = vand.u32 2147483647, %v28
    %v33 = vand.u32 2147483647, %v29
    %v34 = vadd.f32 %v30, 1e-07
    %v35 = vadd.f32 %v31, 1e-07
    %v36 = vadd.f32 %v32, 1e-07
    %v37 = vadd.f32 %v33, 1e-07
    %v38 = vlaneseq
    %v39 = vshrl.u32 %v38, 7
    %vm40 = vcmp.lt.s32.totalorder %v39, 0
    %v41 = vsub.s32 0, %v39
    %v42 = vsel %vm40, %v41, %v39
    %v43 = vshrl.u32 %v42, 2
    %v44 = vand.u32 %v42, 3
    %v45 = vsub.s32 0, %v44
    %v46 = vsel %vm40, %v45, %v44
    %vm47 = vcmp.ne.s32.totalorder %v46, 0
    %vm48 = vcmp.lt.s32.totalorder %v46, 0
    %vm49 = vmand %vm48, %vm47
    %v50 = vadd.s32 %v46, 4
    %v51 = vsel %vm49, %v50, %v46
    %v52 = vsub.s32 %v39, %v51
    %v53 = vadd.s32 %v52, 3
    %v54 = vrot.slane %v34, 1
    %v55 = vrot.slane %v35, 1
    %v56 = vrot.slane %v36, 1
    %v57 = vrot.slane %v37, 1
    %v58 = vrot.slane %v39, 1
    %v59 = vrot.slane %v34, 5
    %v60 = vrot.slane %v35, 5
    %v61 = vrot.slane %v36, 5
    %v62 = vrot.slane %v37, 5
    %v63 = vrot.slane %v39, 5
    %vm64 = vcmp.ge.s32.totalorder %v58, %v52
    %vm65 = vcmp.le.s32.totalorder %v58, %v53
    %vm66 = vmand %vm64, %vm65
    %v67 = vsel %vm66, %v54, %v59
    %v68 = vsel %vm66, %v55, %v60
    %v69 = vsel %vm66, %v56, %v61
    %v70 = vsel %vm66, %v57, %v62
    %v71 = vsel %vm66, %v58, %v63
    %vm72 = vcmp.gt.f32.partialorder %v67, %v34
    %vm73 = vcmp.gt.f32.partialorder %v68, %v35
    %vm74 = vcmp.gt.f32.partialorder %v69, %v36
    %vm75 = vcmp.gt.f32.partialorder %v70, %v37
    %vm76 = vcmp.eq.f32.partialorder %v67, %v34
    %vm77 = vcmp.eq.f32.partialorder %v68, %v35
    %vm78 = vcmp.eq.f32.partialorder %v69, %v36
    %vm79 = vcmp.eq.f32.partialorder %v70, %v37
    %vm80 = vcmp.lt.s32.totalorder %v71, %v39
    %vm81 = vmand %vm76, %vm80
    %vm82 = vmand %vm77, %vm80
    %vm83 = vmand %vm78, %vm80
    %vm84 = vmand %vm79, %vm80
    %vm85 = vmor %vm72, %vm81
    %vm86 = vmor %vm73, %vm82
    %vm87 = vmor %vm74, %vm83
    %vm88 = vmor %vm75, %vm84
    %v89 = vsel %vm85, 1, 0
    %v90 = vsel %vm86, 1, 0
    %v91 = vsel %vm87, 1, 0
    %v92 = vsel %vm88, 1, 0
    %v93 = vrot.slane %v34, 2
    %v94 = vrot.slane %v35, 2
    %v95 = vrot.slane %v36, 2
    %v96 = vrot.slane %v37, 2
    %v97 = vrot.slane %v39, 2
    %v98 = vrot.slane %v34, 6
    %v99 = vrot.slane %v35, 6
    %v100 = vrot.slane %v36, 6
    %v101 = vrot.slane %v37, 6
    %v102 = vrot.slane %v39, 6
    %vm103 = vcmp.ge.s32.totalorder %v97, %v52
    %vm104 = vcmp.le.s32.totalorder %v97, %v53
    %vm105 = vmand %vm103, %vm104
    %v106 = vsel %vm105, %v93, %v98
    %v107 = vsel %vm105, %v94, %v99
    %v108 = vsel %vm105, %v95, %v100
    %v109 = vsel %vm105, %v96, %v101
    %v110 = vsel %vm105, %v97, %v102
    %vm111 = vcmp.gt.f32.partialorder %v106, %v34
    %vm112 = vcmp.gt.f32.partialorder %v107, %v35
    %vm113 = vcmp.gt.f32.partialorder %v108, %v36
    %vm114 = vcmp.gt.f32.partialorder %v109, %v37
    %vm115 = vcmp.eq.f32.partialorder %v106, %v34
    %vm116 = vcmp.eq.f32.partialorder %v107, %v35
    %vm117 = vcmp.eq.f32.partialorder %v108, %v36
    %vm118 = vcmp.eq.f32.partialorder %v109, %v37
    %vm119 = vcmp.lt.s32.totalorder %v110, %v39
    %vm120 = vmand %vm115, %vm119
    %vm121 = vmand %vm116, %vm119
    %vm122 = vmand %vm117, %vm119
    %vm123 = vmand %vm118, %vm119
    %vm124 = vmor %vm111, %vm120
    %vm125 = vmor %vm112, %vm121
    %vm126 = vmor %vm113, %vm122
    %vm127 = vmor %vm114, %vm123
    %v128 = vsel %vm124, 1, 0
    %v129 = vsel %vm125, 1, 0
    %v130 = vsel %vm126, 1, 0
    %v131 = vsel %vm127, 1, 0
    %v132 = vadd.s32 %v89, %v128
    %v133 = vadd.s32 %v90, %v129
    %v134 = vadd.s32 %v91, %v130
    %v135 = vadd.s32 %v92, %v131
    %v136 = vrot.slane %v34, 3
    %v137 = vrot.slane %v35, 3
    %v138 = vrot.slane %v36, 3
    %v139 = vrot.slane %v37, 3
    %v140 = vrot.slane %v39, 3
    %v141 = vrot.slane %v34, 7
    %v142 = vrot.slane %v35, 7
    %v143 = vrot.slane %v36, 7
    %v144 = vrot.slane %v37, 7
    %v145 = vrot.slane %v39, 7
    %vm146 = vcmp.ge.s32.totalorder %v140, %v52
    %vm147 = vcmp.le.s32.totalorder %v140, %v53
    %vm148 = vmand %vm146, %vm147
    %v149 = vsel %vm148, %v136, %v141
    %v150 = vsel %vm148, %v137, %v142
    %v151 = vsel %vm148, %v138, %v143
    %v152 = vsel %vm148, %v139, %v144
    %v153 = vsel %vm148, %v140, %v145
    %vm154 = vcmp.gt.f32.partialorder %v149, %v34
    %vm155 = vcmp.gt.f32.partialorder %v150, %v35
    %vm156 = vcmp.gt.f32.partialorder %v151, %v36
    %vm157 = vcmp.gt.f32.partialorder %v152, %v37
    %vm158 = vcmp.eq.f32.partialorder %v149, %v34
    %vm159 = vcmp.eq.f32.partialorder %v150, %v35
    %vm160 = vcmp.eq.f32.partialorder %v151, %v36
    %vm161 = vcmp.eq.f32.partialorder %v152, %v37
    %vm162 = vcmp.lt.s32.totalorder %v153, %v39
    %vm163 = vmand %vm158, %vm162
    %vm164 = vmand %vm159, %vm162
    %vm165 = vmand %vm160, %vm162
    %vm166 = vmand %vm161, %vm162
    %vm167 = vmor %vm154, %vm163
    %vm168 = vmor %vm155, %vm164
    %vm169 = vmor %vm156, %vm165
    %vm170 = vmor %vm157, %vm166
    %v171 = vsel %vm167, 1, 0
    %v172 = vsel %vm168, 1, 0
    %v173 = vsel %vm169, 1, 0
    %v174 = vsel %vm170, 1, 0
    %v175 = vadd.s32 %v132, %v171
    %v176 = vadd.s32 %v133, %v172
    %v177 = vadd.s32 %v134, %v173
    %v178 = vadd.s32 %v135, %v174
    %vm179 = vcmp.lt.s32.totalorder %v175, 2
    %vm180 = vcmp.lt.s32.totalorder %v176, 2
    %vm181 = vcmp.lt.s32.totalorder %v177, 2
    %vm182 = vcmp.lt.s32.totalorder %v178, 2
    %v183 = vsel %vm179, 1, 0
    %v184 = vsel %vm180, 1, 0
    %v185 = vsel %vm181, 1, 0
    %v186 = vsel %vm182, 1, 0
    %v187 = vcvt.s32.f32 %v183
    %v188 = vcvt.s32.f32 %v184
    %v189 = vcvt.s32.f32 %v185
    %v190 = vcvt.s32.f32 %v186
    %v191 = vmax.f32 %v187, 0.0
    %v192 = vmax.f32 %v188, 0.0
    %v193 = vmax.f32 %v189, 0.0
    %v194 = vmax.f32 %v190, 0.0
    %v195 = vmul.f32 %v26, %v191
    %v196 = vmul.f32 %v27, %v192
    %v197 = vmul.f32 %v28, %v193
    %v198 = vmul.f32 %v29, %v194
    %199 = vst [vmem:[#allocation5] sm:$0xff] %v195
    %200 = vst [vmem:[#allocation5 + $0x8] sm:$0xff] %v196
    %201 = vst [vmem:[#allocation5 + $0x10] sm:$0xff] %v197
    %202 = vst [vmem:[#allocation5 + $0x18] sm:$0xff] %v198
    %203 = vst [vmem:[#allocation6] sm:$0xff] %v191
    %204 = vst [vmem:[#allocation6 + $0x8] sm:$0xff] %v192
    %205 = vst [vmem:[#allocation6 + $0x10] sm:$0xff] %v193
    %206 = vst [vmem:[#allocation6 + $0x18] sm:$0xff] %v194
    // Predicated region
    $region10: #{tpu_custom_call.1} parent=1 // pred_check
      _
    $region11: #{tpu_custom_call.1} parent=1 // pred_check_branch
      %208 = sbr.rel (0) target = $region13
    $region12: #{tpu_custom_call.1} parent=1 // pred_region
      %210 = vsyncadd [#allocation4], 0
      %s212 = sshll.u32 [#allocation5], 4
      %s213 = int_to_ptr.vmem [resolvable:$true] %s212
      %s214 = sshll.u32 %s1, 4
      %s215 = int_to_ptr.hbm [resolvable:$true] %s214
      %217 = dma.vmem_to_hbm [thread:$0]  %s213, 512, %s215, [#allocation4]
    $region13: #{tpu_custom_call.1} parent=1 // pred_fallthru
      _
    // Predicated region
    $region14: #{tpu_custom_call.1} parent=1 // pred_check
      _
    $region15: #{tpu_custom_call.1} parent=1 // pred_check_branch
      %219 = sbr.rel (0) target = $region17
    $region16: #{tpu_custom_call.1} parent=1 // pred_region
      %221 = vsyncadd [#allocation7], 0
      %s223 = sshll.u32 [#allocation6], 4
      %s224 = int_to_ptr.vmem [resolvable:$true] %s223
      %s225 = sshll.u32 %s2, 4
      %s226 = int_to_ptr.hbm [resolvable:$true] %s225
      %228 = dma.vmem_to_hbm [thread:$0]  %s224, 512, %s226, [#allocation7]
    $region17: #{tpu_custom_call.1} parent=1 // pred_fallthru
      _
    // Predicated region
    $region18: #{tpu_custom_call.1} parent=1 // pred_check
      _
    $region19: #{tpu_custom_call.1} parent=1 // pred_check_branch
      %230 = sbr.rel (0) target = $region21
    $region20: #{tpu_custom_call.1} parent=1 // pred_region
      %232 = dma.done [#allocation4], 512
    $region21: #{tpu_custom_call.1} parent=1 // pred_fallthru
      _
    // Predicated region
    $region22: #{tpu_custom_call.1} parent=1 // pred_check
      _
    $region23: #{tpu_custom_call.1} parent=1 // pred_check_branch
      %234 = sbr.rel (0) target = $region25
    $region24: #{tpu_custom_call.1} parent=1 // pred_region
      %236 = dma.done [#allocation7], 512
    $region25: #{tpu_custom_call.1} parent=1 // pred_fallthru
      _
    %237 = vsyncpa [#allocation3], 1
    %238 = vsyncpa [#allocation4], 1
    %239 = vsyncpa [#allocation7], 1

</llo_original>
